<compile_context>
chip_gen: v7x
topology: tpu7x:2x2x1
jax: 0.10.0
libtpu: 0.0.40
codegen_flags: <defaults>
</compile_context>

<pallas_src>
import jax
import jax.numpy as jnp
from jax.experimental import pallas as pl
from jax.experimental.pallas import tpu as pltpu

IN_FEATURES = 768
OUT_FEATURES = 1

# Below this batch size the fixed pallas_call / DMA overhead dwarfs the work;
# emit a plain XLA dot instead (review item: tiny-batch fallback).
MIN_PALLAS_BATCH = 256


def _round_up(n, m):
    return ((n + m - 1) // m) * m


def _vmem_capacity_bytes():
    """Best-effort per-core VMEM capacity query; None if unavailable."""
    try:
        info = pltpu.get_tpu_info()
        cap = int(getattr(info, "vmem_capacity_bytes", 0))
        return cap if cap > 0 else None
    except Exception:
        return None


def _pick_tiling():
    """Generation-aware (row_tile, vmem_limit_bytes).

    v7x-class (<= ~80 MiB per-TC VMEM, 3.2 TB/s HBM): a 1024-row f32 tile DMAs
    in ~1 us, so the ~0.35 us per-grid-step overhead is 25-35% of the step ->
    use 4096-row tiles (12 MiB/buffer, 24 MiB double-buffered, < 48 MiB limit).

    v5e/v6e (128 MiB VMEM, 0.8-1.4 TB/s): 2048-row tiles (6 MiB/buffer,
    12 MiB double-buffered) already put the kernel at >90% of HBM roofline;
    a 32 MiB scoped limit is within v6e's default and safely raises v5e's
    16 MiB default (physical VMEM is 128 MiB).
    """
    vmem = _vmem_capacity_bytes()
    if vmem is None:
        return 1024, None            # unknown chip: conservative, default limit
    if vmem <= (80 << 20):
        return 4096, 48 << 20        # v7x-class
    return 2048, 32 << 20            # v5e / v6e


def fc_kernel(x_ref, wt_ref, b_ref, o_ref):
    # x_ref : (TB, 768) VMEM activation tile (streamed, double-buffered)
    # wt_ref: (768, 1)  VMEM weight column, grid-invariant -> resident
    # b_ref : (1,)      SMEM scalar bias
    # o_ref : (TB, 1)   output block
    x = x_ref[...].astype(jnp.float32)
    w = wt_ref[...].astype(jnp.float32)
    # Mat-vec on the MXU (idle otherwise); f32 accumulation.  Wasted MXU width
    # is free: the kernel is HBM-read bound (2 flops per 4 bytes of x).
    acc = jnp.dot(x, w, preferred_element_type=jnp.float32)   # (TB, 1)
    o_ref[...] = (acc + b_ref[0]).astype(o_ref.dtype)


def fc_forward(x, weight, bias, *, tb=None, force_pallas=False):
    """x: (B, 768); weight: (1, 768) (PyTorch nn.Linear layout); bias: (1,).

    Returns (B, 1) = x @ weight.T + bias (same semantics as nn.Linear(768, 1)).
    """
    B, F = x.shape
    assert F == IN_FEATURES

    # Tiny batches: the fused XLA dot is strictly cheaper than a kernel launch.
    if B < MIN_PALLAS_BATCH and not force_pallas:
        out = jnp.dot(x.astype(jnp.float32), weight.astype(jnp.float32).T,
                      preferred_element_type=jnp.float32) + bias
        return out.astype(x.dtype)

    auto_tb, vmem_limit = _pick_tiling()
    if tb is None:
        tb = auto_tb

    if B <= 8:
        # Forced tiny-batch kernel path: one full-array block (block_shape ==
        # array shape always satisfies the TPU (8, 128) tiling rule).
        tb = B
    elif B <= tb:
        # Moderate batches: keep >= ~4 grid steps so both v7x TensorCores get
        # work and the DMA/compute pipeline has something to overlap, instead
        # of collapsing to one un-pipelined block.
        tb = max(8, min(tb, _round_up(pl.cdiv(B, 4), 8)))

    grid = (pl.cdiv(B, tb),)
    weight_t = weight.T                     # (768, 1): MXU rhs, no in-kernel transpose
    x_itemsize = jnp.dtype(x.dtype).itemsize
    cost = pl.CostEstimate(
        flops=2 * B * IN_FEATURES,
        transcendentals=0,
        bytes_accessed=(B * IN_FEATURES * x_itemsize          # activations (dominant)
                        + B * OUT_FEATURES * x_itemsize        # output
                        + IN_FEATURES * OUT_FEATURES * 4       # weight (once)
                        + OUT_FEATURES * 4),                   # bias
    )

    out = pl.pallas_call(
        fc_kernel,
        out_shape=jax.ShapeDtypeStruct((B, OUT_FEATURES), x.dtype),
        grid_spec=pltpu.PrefetchScalarGridSpec(
            num_scalar_prefetch=0,
            grid=grid,
            in_specs=[
                # Stream x in (tb, 768) row tiles; Pallas double-buffers the DMA.
                pl.BlockSpec((tb, IN_FEATURES), lambda i: (i, 0)),
                # Weight column: full block, constant index_map -> DMA'd once.
                pl.BlockSpec((IN_FEATURES, OUT_FEATURES), lambda i: (0, 0)),
                # Bias: whole (1,) array kept in SMEM, read as a scalar.
                pl.BlockSpec(memory_space=pltpu.MemorySpace.SMEM),
            ],
            out_specs=pl.BlockSpec((tb, OUT_FEATURES), lambda i: (i, 0)),
        ),
        compiler_params=pltpu.CompilerParams(
            # Row tiles are independent: shard across v7x's two TensorCores.
            dimension_semantics=("parallel",),
            vmem_limit_bytes=vmem_limit,
        ),
        cost_estimate=cost,
    )(x, weight_t, bias)
    return out


if __name__ == "__main__":
    key = jax.random.PRNGKey(0)
    kx, kw, kb, kx2 = jax.random.split(key, 4)

    # nn.Linear(768, 1) parameters (PyTorch layout: weight (1, 768), bias (1,)).
    weight = jax.random.normal(kw, (OUT_FEATURES, IN_FEATURES), dtype=jnp.float32) * 0.02
    bias = jax.random.normal(kb, (OUT_FEATURES,), dtype=jnp.float32) * 0.02

    # Tolerance note: the kernel's MXU f32 mat-vec may be computed via multi-
    # pass bf16 emulation depending on generation/precision mode; 1e-3 over a
    # 768-term reduction still catches any indexing/bias/shape bug by orders
    # of magnitude.
    TOL = 1e-3

    # 1) Small batch (the module's expected usage), forced through the Pallas
    #    kernel (single full-array block) so the kernel path is exercised.
    B = 2
    x = jax.random.normal(kx, (B, IN_FEATURES), dtype=jnp.float32)
    out = jax.block_until_ready(fc_forward(x, weight, bias, force_pallas=True))
    ref = x @ weight.T + bias
    assert out.shape == (B, OUT_FEATURES)
    assert jnp.allclose(out, ref, atol=TOL, rtol=TOL)

    # 1b) Same small batch through the default path (XLA fallback for tiny B).
    out_fb = jax.block_until_ready(fc_forward(x, weight, bias))
    assert out_fb.shape == (B, OUT_FEATURES)
    assert jnp.allclose(out_fb, ref, atol=TOL, rtol=TOL)

    # 2) Multi-step pipelined grid with a masked partial tail block.
    B2 = 1037
    x2 = jax.random.normal(kx2, (B2, IN_FEATURES), dtype=jnp.float32)
    out2 = jax.block_until_ready(fc_forward(x2, weight, bias))
    ref2 = x2 @ weight.T + bias
    assert out2.shape == (B2, OUT_FEATURES)
    assert jnp.allclose(out2, ref2, atol=TOL, rtol=TOL)

    # 3) bf16 activations (halves HBM-read bytes for this read-bound op);
    #    in-kernel accumulation stays f32, output cast back to bf16.
    x2_bf16 = x2.astype(jnp.bfloat16)
    out3 = jax.block_until_ready(fc_forward(x2_bf16, weight, bias))
    ref3 = x2_bf16.astype(jnp.float32) @ weight.T + bias
    assert out3.shape == (B2, OUT_FEATURES)
    assert jnp.allclose(out3.astype(jnp.float32), ref3, atol=2e-2, rtol=2e-2)

    print("KERNEL_OK")
</pallas_src>

<mosaic_0001>
module attributes {stable_mosaic.version = 11 : i64} {
  func.func @fc_kernel(%arg0: i32, %arg1: memref<2x768xf32, #tpu.memory_space<vmem>>, %arg2: memref<768x1xf32, #tpu.memory_space<vmem>>, %arg3: memref<1xf32, #tpu.memory_space<smem>>, %arg4: memref<2x1xf32, #tpu.memory_space<vmem>>) attributes {dimension_semantics = [#tpu.dimension_semantics<parallel>], iteration_bounds = array<i64: 1>, scalar_prefetch = 0 : i64, scratch_operands = 0 : i64, tpu.core_type = #tpu.core_type<tc>, window_params = [{transform_indices = @transform_0, window_bounds = array<i64: 2, 768>}, {pipeline_mode = #tpu.pipeline_mode<synchronous>, transform_indices = @transform_1, window_bounds = array<i64: 768, 1>}, {transform_indices = @transform_2, window_bounds = array<i64: 1>}, {transform_indices = @transform_3, window_bounds = array<i64: 2, 1>}]} {
    %c0 = arith.constant 0 : index
    %c0_0 = arith.constant 0 : index
    %0 = vector.load %arg1[%c0, %c0_0] : memref<2x768xf32, #tpu.memory_space<vmem>>, vector<2x768xf32>
    %c0_1 = arith.constant 0 : index
    %c0_2 = arith.constant 0 : index
    %1 = vector.load %arg2[%c0_1, %c0_2] : memref<768x1xf32, #tpu.memory_space<vmem>>, vector<768x1xf32>
    %cst = arith.constant dense<0.000000e+00> : vector<2x1xf32>
    %2 = tpu.matmul %0, %1, %cst {dimension_numbers = #tpu.dot_dimension_numbers<[1], [0], [0], [1], [0, 0, 1, 1], [], []>} : vector<2x768xf32>, vector<768x1xf32>, vector<2x1xf32> -> vector<2x1xf32>
    %c0_3 = arith.constant 0 : index
    %3 = memref.load %arg3[%c0_3] : memref<1xf32, #tpu.memory_space<smem>>
    %4 = vector.broadcast %3 : f32 to vector<2x1xf32>
    %5 = arith.addf %2, %4 : vector<2x1xf32>
    %c0_4 = arith.constant 0 : index
    %c0_5 = arith.constant 0 : index
    %6 = vector.load %arg4[%c0_4, %c0_5] : memref<2x1xf32, #tpu.memory_space<vmem>>, vector<2x1xf32>
    tpu.vector_store %arg4[%c0_4, %c0_5], %5 {strides = array<i32>} : memref<2x1xf32, #tpu.memory_space<vmem>>, vector<2x1xf32>,
    return
  }
  func.func @transform_0(%arg0: i32) -> (i32, i32) {
    %c0_i32 = arith.constant 0 : i32
    %c0_i32_0 = arith.constant 0 : i32
    return %arg0, %c0_i32 : i32, i32
  }
  func.func @transform_1(%arg0: i32) -> (i32, i32) {
    %c0_i32 = arith.constant 0 : i32
    %c0_i32_0 = arith.constant 0 : i32
    %c0_i32_1 = arith.constant 0 : i32
    return %c0_i32, %c0_i32_0 : i32, i32
  }
  func.func @transform_2(%arg0: i32) -> i32 {
    %c0_i32 = arith.constant 0 : i32
    %c0_i32_0 = arith.constant 0 : i32
    return %c0_i32 : i32
  }
  func.func @transform_3(%arg0: i32) -> (i32, i32) {
    %c0_i32 = arith.constant 0 : i32
    %c0_i32_0 = arith.constant 0 : i32
    return %arg0, %c0_i32 : i32, i32
  }
}

</mosaic_0001>

<llo_original>
// kernel: tpu_custom_call.1
$region0: #{tpu_custom_call.1}
  #allocation0 [shape = 'u32[]', space=smem, size = 0x4, offset = 0x4, fixed_abs, tag = 'smem constant byte address 0x4 - core index']
  #allocation1 [shape = 'u32[144,128]{1,0:T(1,128)}', space=vmem, size = 0x12000, scoped, tag = 'internal scratch']
  #allocation2 [shape = 'f32[1]{0:T(128)S(6)}', space=smem, size = 0x200, scoped, tag = 'scoped memory for tpu_custom_call.1']
  %s0 = inlined_call_operand.vmem [shape: f32[2,768], index: 0, kind: input, shape index: {}]
  %s1 = inlined_call_operand.vmem [shape: f32[768,1], index: 1, kind: input, shape index: {}]
  %s2 = inlined_call_operand.<no memory space> [shape: f32[1], index: 2, kind: input, shape index: {}]
  %s3 = inlined_call_operand.vmem [shape: f32[2,1], index: 3, kind: output, shape index: {}]
  %s4 = sld [smem:[#allocation0]]
  $region22: #{tpu_custom_call.1} parent=0
    _
  %s6 = ssub.s32 1, %s4
  %s7 = scalar_select 0, %s6, %s4
  %8 = sst [smem:[#allocation2]] %s2
  // Predicated region
  $region2: #{tpu_custom_call.1} parent=0 // pred_check
    _
  $region3: #{tpu_custom_call.1} parent=0 // pred_check_branch
    %10 = sbr.rel (0) target = $region5
  $region4: #{tpu_custom_call.1} parent=0 // pred_region
    _
  $region5: #{tpu_custom_call.1} parent=0 // pred_fallthru
    _
  // Predicated region
  $region6: #{tpu_custom_call.1} parent=0 // pred_check
    _
  $region7: #{tpu_custom_call.1} parent=0 // pred_check_branch
    %12 = sbr.rel (0) target = $region9
  $region8: #{tpu_custom_call.1} parent=0 // pred_region
    _
  $region9: #{tpu_custom_call.1} parent=0 // pred_fallthru
    _
  // Predicated region
  $region10: #{tpu_custom_call.1} parent=0 // pred_check
    _
  $region11: #{tpu_custom_call.1} parent=0 // pred_check_branch
    %14 = sbr.rel (0) target = $region13
  $region12: #{tpu_custom_call.1} parent=0 // pred_region
    _
  $region13: #{tpu_custom_call.1} parent=0 // pred_fallthru
    _
  %v15 = vld [vmem:[%s0] sm:$0xff]
  %v16 = vld [vmem:[%s0 + $0x8] sm:$0xf]
  %v17 = vld [vmem:[%s1] sm:$0xff]
  %v18 = vld [vmem:[%s1 + $0x8] sm:$0xff]
  %v19 = vld [vmem:[%s1 + $0x10] sm:$0xff]
  %v20 = vld [vmem:[%s1 + $0x18] sm:$0xff]
  %v21 = vld [vmem:[%s1 + $0x20] sm:$0xff]
  %v22 = vld [vmem:[%s1 + $0x28] sm:$0xff]
  %v23 = vld [vmem:[%s1 + $0x30] sm:$0xff]
  %v24 = vld [vmem:[%s1 + $0x38] sm:$0xff]
  %v25 = vld [vmem:[%s1 + $0x40] sm:$0xff]
  %v26 = vld [vmem:[%s1 + $0x48] sm:$0xff]
  %v27 = vld [vmem:[%s1 + $0x50] sm:$0xff]
  %v28 = vld [vmem:[%s1 + $0x58] sm:$0xff]
  %v29 = vld [vmem:[%s1 + $0x60] sm:$0xff]
  %v30 = vld [vmem:[%s1 + $0x68] sm:$0xff]
  %v31 = vld [vmem:[%s1 + $0x70] sm:$0xff]
  %v32 = vld [vmem:[%s1 + $0x78] sm:$0xff]
  %v33 = vld [vmem:[%s1 + $0x80] sm:$0xff]
  %v34 = vld [vmem:[%s1 + $0x88] sm:$0xff]
  %v35 = vld [vmem:[%s1 + $0x90] sm:$0xff]
  %v36 = vld [vmem:[%s1 + $0x98] sm:$0xff]
  %v37 = vld [vmem:[%s1 + $0xa0] sm:$0xff]
  %v38 = vld [vmem:[%s1 + $0xa8] sm:$0xff]
  %v39 = vld [vmem:[%s1 + $0xb0] sm:$0xff]
  %v40 = vld [vmem:[%s1 + $0xb8] sm:$0xff]
  %v41 = vld [vmem:[%s1 + $0xc0] sm:$0xff]
  %v42 = vld [vmem:[%s1 + $0xc8] sm:$0xff]
  %v43 = vld [vmem:[%s1 + $0xd0] sm:$0xff]
  %v44 = vld [vmem:[%s1 + $0xd8] sm:$0xff]
  %v45 = vld [vmem:[%s1 + $0xe0] sm:$0xff]
  %v46 = vld [vmem:[%s1 + $0xe8] sm:$0xff]
  %v47 = vld [vmem:[%s1 + $0xf0] sm:$0xff]
  %v48 = vld [vmem:[%s1 + $0xf8] sm:$0xff]
  %v49 = vld [vmem:[%s1 + $0x100] sm:$0xff]
  %v50 = vld [vmem:[%s1 + $0x108] sm:$0xff]
  %v51 = vld [vmem:[%s1 + $0x110] sm:$0xff]
  %v52 = vld [vmem:[%s1 + $0x118] sm:$0xff]
  %v53 = vld [vmem:[%s1 + $0x120] sm:$0xff]
  %v54 = vld [vmem:[%s1 + $0x128] sm:$0xff]
  %v55 = vld [vmem:[%s1 + $0x130] sm:$0xff]
  %v56 = vld [vmem:[%s1 + $0x138] sm:$0xff]
  %v57 = vld [vmem:[%s1 + $0x140] sm:$0xff]
  %v58 = vld [vmem:[%s1 + $0x148] sm:$0xff]
  %v59 = vld [vmem:[%s1 + $0x150] sm:$0xff]
  %v60 = vld [vmem:[%s1 + $0x158] sm:$0xff]
  %v61 = vld [vmem:[%s1 + $0x160] sm:$0xff]
  %v62 = vld [vmem:[%s1 + $0x168] sm:$0xff]
  %v63 = vld [vmem:[%s1 + $0x170] sm:$0xff]
  %v64 = vld [vmem:[%s1 + $0x178] sm:$0xff]
  %v65 = vld [vmem:[%s1 + $0x180] sm:$0xff]
  %v66 = vld [vmem:[%s1 + $0x188] sm:$0xff]
  %v67 = vld [vmem:[%s1 + $0x190] sm:$0xff]
  %v68 = vld [vmem:[%s1 + $0x198] sm:$0xff]
  %v69 = vld [vmem:[%s1 + $0x1a0] sm:$0xff]
  %v70 = vld [vmem:[%s1 + $0x1a8] sm:$0xff]
  %v71 = vld [vmem:[%s1 + $0x1b0] sm:$0xff]
  %v72 = vld [vmem:[%s1 + $0x1b8] sm:$0xff]
  %v73 = vld [vmem:[%s1 + $0x1c0] sm:$0xff]
  %v74 = vld [vmem:[%s1 + $0x1c8] sm:$0xff]
  %v75 = vld [vmem:[%s1 + $0x1d0] sm:$0xff]
  %v76 = vld [vmem:[%s1 + $0x1d8] sm:$0xff]
  %v77 = vld [vmem:[%s1 + $0x1e0] sm:$0xff]
  %v78 = vld [vmem:[%s1 + $0x1e8] sm:$0xff]
  %v79 = vld [vmem:[%s1 + $0x1f0] sm:$0xff]
  %v80 = vld [vmem:[%s1 + $0x1f8] sm:$0xff]
  %v81 = vld [vmem:[%s1 + $0x200] sm:$0xff]
  %v82 = vld [vmem:[%s1 + $0x208] sm:$0xff]
  %v83 = vld [vmem:[%s1 + $0x210] sm:$0xff]
  %v84 = vld [vmem:[%s1 + $0x218] sm:$0xff]
  %v85 = vld [vmem:[%s1 + $0x220] sm:$0xff]
  %v86 = vld [vmem:[%s1 + $0x228] sm:$0xff]
  %v87 = vld [vmem:[%s1 + $0x230] sm:$0xff]
  %v88 = vld [vmem:[%s1 + $0x238] sm:$0xff]
  %v89 = vld [vmem:[%s1 + $0x240] sm:$0xff]
  %v90 = vld [vmem:[%s1 + $0x248] sm:$0xff]
  %v91 = vld [vmem:[%s1 + $0x250] sm:$0xff]
  %v92 = vld [vmem:[%s1 + $0x258] sm:$0xff]
  %v93 = vld [vmem:[%s1 + $0x260] sm:$0xff]
  %v94 = vld [vmem:[%s1 + $0x268] sm:$0xff]
  %v95 = vld [vmem:[%s1 + $0x270] sm:$0xff]
  %v96 = vld [vmem:[%s1 + $0x278] sm:$0xff]
  %v97 = vld [vmem:[%s1 + $0x280] sm:$0xff]
  %v98 = vld [vmem:[%s1 + $0x288] sm:$0xff]
  %v99 = vld [vmem:[%s1 + $0x290] sm:$0xff]
  %v100 = vld [vmem:[%s1 + $0x298] sm:$0xff]
  %v101 = vld [vmem:[%s1 + $0x2a0] sm:$0xff]
  %v102 = vld [vmem:[%s1 + $0x2a8] sm:$0xff]
  %v103 = vld [vmem:[%s1 + $0x2b0] sm:$0xff]
  %v104 = vld [vmem:[%s1 + $0x2b8] sm:$0xff]
  %v105 = vld [vmem:[%s1 + $0x2c0] sm:$0xff]
  %v106 = vld [vmem:[%s1 + $0x2c8] sm:$0xff]
  %v107 = vld [vmem:[%s1 + $0x2d0] sm:$0xff]
  %v108 = vld [vmem:[%s1 + $0x2d8] sm:$0xff]
  %v109 = vld [vmem:[%s1 + $0x2e0] sm:$0xff]
  %v110 = vld [vmem:[%s1 + $0x2e8] sm:$0xff]
  %v111 = vld [vmem:[%s1 + $0x2f0] sm:$0xff]
  %v112 = vld [vmem:[%s1 + $0x2f8] sm:$0xff]
  %s113 = sld [smem:[#allocation2]]
  %v114 = vstv %s113
  %v117 = vcombine.high %v15, %v15
  %v119 = vunpack.c.l.s4 1983009808
  %v120 = vunpack.c.0.s8 %v119
  %v121 = vlaneseq
  %v122 = vshrl.u32 %v121, 7
  %v123 = vsub.s32 %v120, %v122
  %v124 = vrot.slane %v15, %v123
  %v126 = vunpack.c.l.s4 1983009808
  %v127 = vunpack.c.0.s8 %v126
  %v128 = vlaneseq
  %v129 = vshrl.u32 %v128, 7
  %v130 = vsub.s32 %v127, %v129
  %v131 = vrot.slane %v117, %v130
  %v132 = vcombine.high %v124, %v124
  %v133 = vcombine.high %v131, %v131
  %v135 = vunpack.c.l.s4 1983009808
  %v136 = vunpack.c.0.s8 %v135
  %v137 = vlaneseq
  %v138 = vshrl.u32 %v137, 7
  %v139 = vsub.s32 %v136, %v138
  %v140 = vrot.slane %v16, %v139
  %v141 = vcombine.high %v140, %v140
  %148 = vmatprep.subr.mxu0 0.0
  %149 = vmatpush1.msra.mxu0 %v17
  %150 = vmatprep.subr.mxu0 0.0
  %151 = vmatpush1.msra.mxu0 %v18
  %152 = vmatprep.subr.mxu0 0.0
  %153 = vmatpush1.msra.mxu0 %v19
  %154 = vmatprep.subr.mxu0 0.0
  %155 = vmatpush1.msra.mxu0 %v20
  %156 = vmatprep.subr.mxu0 0.0
  %157 = vmatpush1.msra.mxu0 %v21
  %158 = vmatprep.subr.mxu0 0.0
  %159 = vmatpush1.msra.mxu0 %v22
  %160 = vmatprep.subr.mxu0 0.0
  %161 = vmatpush1.msra.mxu0 %v23
  %162 = vmatprep.subr.mxu0 0.0
  %163 = vmatpush1.msra.mxu0 %v24
  %164 = vmatprep.subr.mxu0 0.0
  %165 = vmatpush1.msra.mxu0 %v25
  %166 = vmatprep.subr.mxu0 0.0
  %167 = vmatpush1.msra.mxu0 %v26
  %168 = vmatprep.subr.mxu0 0.0
  %169 = vmatpush1.msra.mxu0 %v27
  %170 = vmatprep.subr.mxu0 0.0
  %171 = vmatpush1.msra.mxu0 %v28
  %172 = vmatprep.subr.mxu0 0.0
  %173 = vmatpush1.msra.mxu0 %v29
  %174 = vmatprep.subr.mxu0 0.0
  %175 = vmatpush1.msra.mxu0 %v30
  %176 = vmatprep.subr.mxu0 0.0
  %177 = vmatpush1.msra.mxu0 %v31
  %178 = vmatprep.subr.mxu0 0.0
  %179 = vmatpush1.msra.mxu0 %v32
  %180 = vmatprep.subr.mxu0 0.0
  %181 = vmatpush1.msra.mxu0 %v33
  %182 = vmatprep.subr.mxu0 0.0
  %183 = vmatpush1.msra.mxu0 %v34
  %184 = vmatprep.subr.mxu0 0.0
  %185 = vmatpush1.msra.mxu0 %v35
  %186 = vmatprep.subr.mxu0 0.0
  %187 = vmatpush1.msra.mxu0 %v36
  %188 = vmatprep.subr.mxu0 0.0
  %189 = vmatpush1.msra.mxu0 %v37
  %190 = vmatprep.subr.mxu0 0.0
  %191 = vmatpush1.msra.mxu0 %v38
  %192 = vmatprep.subr.mxu0 0.0
  %193 = vmatpush1.msra.mxu0 %v39
  %194 = vmatprep.subr.mxu0 0.0
  %195 = vmatpush1.msra.mxu0 %v40
  %196 = vmatprep.subr.mxu0 0.0
  %197 = vmatpush1.msra.mxu0 %v41
  %198 = vmatprep.subr.mxu0 0.0
  %199 = vmatpush1.msra.mxu0 %v42
  %200 = vmatprep.subr.mxu0 0.0
  %201 = vmatpush1.msra.mxu0 %v43
  %202 = vmatprep.subr.mxu0 0.0
  %203 = vmatpush1.msra.mxu0 %v44
  %204 = vmatprep.subr.mxu0 0.0
  %205 = vmatpush1.msra.mxu0 %v45
  %206 = vmatprep.subr.mxu0 0.0
  %207 = vmatpush1.msra.mxu0 %v46
  %208 = vmatprep.subr.mxu0 0.0
  %209 = vmatpush1.msra.mxu0 %v47
  %210 = vmatprep.subr.mxu0 0.0
  %211 = vmatpush1.msra.mxu0 %v48
  %212 = vmatprep.mubr.f32.mxu0 %v132
  %213 = vmatmul.mubr.f32.gmra.mrb[0].mxu0 %v124
  %v214 = vpop.f32.mrb[0].mxu0
  %v215 = vadd.f32 %v114, %v214
  %v216 = vpop.f32.mrb[0].mxu0
  %217 = vdwg.mxu0
  %218 = vmatprep.subr.mxu0 0.0
  %219 = vmatpush1.msra.mxu0 %v49
  %220 = vmatprep.subr.mxu0 0.0
  %221 = vmatpush1.msra.mxu0 %v50
  %222 = vmatprep.subr.mxu0 0.0
  %223 = vmatpush1.msra.mxu0 %v51
  %224 = vmatprep.subr.mxu0 0.0
  %225 = vmatpush1.msra.mxu0 %v52
  %226 = vmatprep.subr.mxu0 0.0
  %227 = vmatpush1.msra.mxu0 %v53
  %228 = vmatprep.subr.mxu0 0.0
  %229 = vmatpush1.msra.mxu0 %v54
  %230 = vmatprep.subr.mxu0 0.0
  %231 = vmatpush1.msra.mxu0 %v55
  %232 = vmatprep.subr.mxu0 0.0
  %233 = vmatpush1.msra.mxu0 %v56
  %234 = vmatprep.subr.mxu0 0.0
  %235 = vmatpush1.msra.mxu0 %v57
  %236 = vmatprep.subr.mxu0 0.0
  %237 = vmatpush1.msra.mxu0 %v58
  %238 = vmatprep.subr.mxu0 0.0
  %239 = vmatpush1.msra.mxu0 %v59
  %240 = vmatprep.subr.mxu0 0.0
  %241 = vmatpush1.msra.mxu0 %v60
  %242 = vmatprep.subr.mxu0 0.0
  %243 = vmatpush1.msra.mxu0 %v61
  %244 = vmatprep.subr.mxu0 0.0
  %245 = vmatpush1.msra.mxu0 %v62
  %246 = vmatprep.subr.mxu0 0.0
  %247 = vmatpush1.msra.mxu0 %v63
  %248 = vmatprep.subr.mxu0 0.0
  %249 = vmatpush1.msra.mxu0 %v64
  %250 = vmatprep.subr.mxu0 0.0
  %251 = vmatpush1.msra.mxu0 %v65
  %252 = vmatprep.subr.mxu0 0.0
  %253 = vmatpush1.msra.mxu0 %v66
  %254 = vmatprep.subr.mxu0 0.0
  %255 = vmatpush1.msra.mxu0 %v67
  %256 = vmatprep.subr.mxu0 0.0
  %257 = vmatpush1.msra.mxu0 %v68
  %258 = vmatprep.subr.mxu0 0.0
  %259 = vmatpush1.msra.mxu0 %v69
  %260 = vmatprep.subr.mxu0 0.0
  %261 = vmatpush1.msra.mxu0 %v70
  %262 = vmatprep.subr.mxu0 0.0
  %263 = vmatpush1.msra.mxu0 %v71
  %264 = vmatprep.subr.mxu0 0.0
  %265 = vmatpush1.msra.mxu0 %v72
  %266 = vmatprep.subr.mxu0 0.0
  %267 = vmatpush1.msra.mxu0 %v73
  %268 = vmatprep.subr.mxu0 0.0
  %269 = vmatpush1.msra.mxu0 %v74
  %270 = vmatprep.subr.mxu0 0.0
  %271 = vmatpush1.msra.mxu0 %v75
  %272 = vmatprep.subr.mxu0 0.0
  %273 = vmatpush1.msra.mxu0 %v76
  %274 = vmatprep.subr.mxu0 0.0
  %275 = vmatpush1.msra.mxu0 %v77
  %276 = vmatprep.subr.mxu0 0.0
  %277 = vmatpush1.msra.mxu0 %v78
  %278 = vmatprep.subr.mxu0 0.0
  %279 = vmatpush1.msra.mxu0 %v79
  %280 = vmatprep.subr.mxu0 0.0
  %281 = vmatpush1.msra.mxu0 %v80
  %282 = vmatprep.mubr.f32.mxu0 %v133
  %283 = vmatmul.mubr.f32.gmra.mrb[0].mxu0 %v131
  %v284 = vpop.f32.mrb[0].mxu0
  %v285 = vadd.f32 %v215, %v284
  %v286 = vpop.f32.mrb[0].mxu0
  %287 = vdwg.mxu0
  %288 = vmatprep.subr.mxu0 0.0
  %289 = vmatpush1.msra.mxu0 %v81
  %290 = vmatprep.subr.mxu0 0.0
  %291 = vmatpush1.msra.mxu0 %v82
  %292 = vmatprep.subr.mxu0 0.0
  %293 = vmatpush1.msra.mxu0 %v83
  %294 = vmatprep.subr.mxu0 0.0
  %295 = vmatpush1.msra.mxu0 %v84
  %296 = vmatprep.subr.mxu0 0.0
  %297 = vmatpush1.msra.mxu0 %v85
  %298 = vmatprep.subr.mxu0 0.0
  %299 = vmatpush1.msra.mxu0 %v86
  %300 = vmatprep.subr.mxu0 0.0
  %301 = vmatpush1.msra.mxu0 %v87
  %302 = vmatprep.subr.mxu0 0.0
  %303 = vmatpush1.msra.mxu0 %v88
  %304 = vmatprep.subr.mxu0 0.0
  %305 = vmatpush1.msra.mxu0 %v89
  %306 = vmatprep.subr.mxu0 0.0
  %307 = vmatpush1.msra.mxu0 %v90
  %308 = vmatprep.subr.mxu0 0.0
  %309 = vmatpush1.msra.mxu0 %v91
  %310 = vmatprep.subr.mxu0 0.0
  %311 = vmatpush1.msra.mxu0 %v92
  %312 = vmatprep.subr.mxu0 0.0
  %313 = vmatpush1.msra.mxu0 %v93
  %314 = vmatprep.subr.mxu0 0.0
  %315 = vmatpush1.msra.mxu0 %v94
  %316 = vmatprep.subr.mxu0 0.0
  %317 = vmatpush1.msra.mxu0 %v95
  %318 = vmatprep.subr.mxu0 0.0
  %319 = vmatpush1.msra.mxu0 %v96
  %320 = vmatprep.subr.mxu0 0.0
  %321 = vmatpush1.msra.mxu0 %v97
  %322 = vmatprep.subr.mxu0 0.0
  %323 = vmatpush1.msra.mxu0 %v98
  %324 = vmatprep.subr.mxu0 0.0
  %325 = vmatpush1.msra.mxu0 %v99
  %326 = vmatprep.subr.mxu0 0.0
  %327 = vmatpush1.msra.mxu0 %v100
  %328 = vmatprep.subr.mxu0 0.0
  %329 = vmatpush1.msra.mxu0 %v101
  %330 = vmatprep.subr.mxu0 0.0
  %331 = vmatpush1.msra.mxu0 %v102
  %332 = vmatprep.subr.mxu0 0.0
  %333 = vmatpush1.msra.mxu0 %v103
  %334 = vmatprep.subr.mxu0 0.0
  %335 = vmatpush1.msra.mxu0 %v104
  %336 = vmatprep.subr.mxu0 0.0
  %337 = vmatpush1.msra.mxu0 %v105
  %338 = vmatprep.subr.mxu0 0.0
  %339 = vmatpush1.msra.mxu0 %v106
  %340 = vmatprep.subr.mxu0 0.0
  %341 = vmatpush1.msra.mxu0 %v107
  %342 = vmatprep.subr.mxu0 0.0
  %343 = vmatpush1.msra.mxu0 %v108
  %344 = vmatprep.subr.mxu0 0.0
  %345 = vmatpush1.msra.mxu0 %v109
  %346 = vmatprep.subr.mxu0 0.0
  %347 = vmatpush1.msra.mxu0 %v110
  %348 = vmatprep.subr.mxu0 0.0
  %349 = vmatpush1.msra.mxu0 %v111
  %350 = vmatprep.subr.mxu0 0.0
  %351 = vmatpush1.msra.mxu0 %v112
  %352 = vmatprep.mubr.f32.mxu0 %v141
  %353 = vmatmul.mubr.f32.gmra.mrb[0].mxu0 %v140
  %v354 = vpop.f32.mrb[0].mxu0
  %v355 = vadd.f32 %v285, %v354
  %v356 = vpop.f32.mrb[0].mxu0
  %357 = vdwg.mxu0
  %vm358 = vcmask 1024
  %359 = vst.msk [vmem:[%s3] sm:$0x3] %vm358, %v355
  // Predicated region
  $region14: #{tpu_custom_call.1} parent=0 // pred_check
    _
  $region15: #{tpu_custom_call.1} parent=0 // pred_check_branch
    %361 = sbr.rel (0) target = $region17
  $region16: #{tpu_custom_call.1} parent=0 // pred_region
    _
  $region17: #{tpu_custom_call.1} parent=0 // pred_fallthru
    _
  // Predicated region
  $region18: #{tpu_custom_call.1} parent=0 // pred_check
    _
  $region19: #{tpu_custom_call.1} parent=0 // pred_check_branch
    %363 = sbr.rel (0) target = $region21
  $region20: #{tpu_custom_call.1} parent=0 // pred_region
    _
  $region21: #{tpu_custom_call.1} parent=0 // pred_fallthru
    _

</llo_original>
